<compile_context>
chip_gen: v7x
topology: tpu7x:2x2x1
jax: 0.10.0
libtpu: 0.0.40
codegen_flags: <defaults>
</compile_context>

<pallas_src>
import jax
import jax.numpy as jnp
from jax import lax
from jax.experimental import pallas as pl
from jax.experimental.pallas import tpu as pltpu


def dot_attention_kernel(x_ref, w_ref, len_ref, o_ref):
    x = x_ref[...].astype(jnp.float32)        # (Bt, S, H)
    w = w_ref[...].astype(jnp.float32)        # (1, H) lane-dense
    lengths = len_ref[...]                    # (Bt, 1) int32

    bt, s, _ = x.shape

    # logits[b, t] = <x[b, t, :], w>  -- VPU mul + lane reduce; keeps the natural
    # (S, H) vreg layout and avoids an N=1 MXU matmul + reshape relayout copies.
    logits = jnp.sum(x * w[None, :, :], axis=-1)                 # (Bt, S) f32

    # Fused mask + softmax. Masking logits to -inf before one normalization is
    # mathematically identical to PyTorch's softmax -> mask -> renormalize,
    # halves the reduction/divide work, and removes the underflow/NaN hazard.
    idxes = lax.broadcasted_iota(jnp.int32, (bt, s), 1)
    valid = idxes < lengths                                      # (Bt, S) bool
    logits = jnp.where(valid, logits, jnp.float32(-1e30))

    m = jnp.max(logits, axis=1, keepdims=True)
    e = jnp.where(valid, jnp.exp(logits - m), 0.0)
    denom = jnp.maximum(jnp.sum(e, axis=1, keepdims=True),
                        jnp.float32(1e-30))                      # guard length == 0

    inv = pl.reciprocal(denom, approx=True)                      # EUP slot (free-ish)
    inv = inv * (2.0 - denom * inv)                              # 1 Newton step -> full f32 accuracy
    alphas = e * inv                                             # (Bt, S)

    # Weighted sum over the sequence axis: VPU mul + sublane reduce on the x tile
    # already in vregs (an M=1 matmul would waste the MXU like the logit matmul).
    out = jnp.sum(x * alphas[:, :, None], axis=1)                # (Bt, H)
    o_ref[...] = out.astype(o_ref.dtype)


def _pick_batch_tile(batch, seq_len, hidden, itemsize):
    # Target ~4 MiB of x per tile: big enough to amortize the ~0.35 us/step grid
    # overhead and approach the HBM roofline, small enough that double-buffering
    # fits the default scoped-VMEM limit on v5e (16 MiB) and v6e/v7x (32 MiB).
    bytes_per_row = seq_len * hidden * itemsize
    bt = max(1, (4 * 1024 * 1024) // max(bytes_per_row, 1))
    if bt >= batch:
        return batch
    return max(8, (bt // 8) * 8)   # keep the sublane dim of (Bt, H)/(Bt, 1) tiles aligned


def dot_attention(inputs, lengths, w, *, block_b=None):
    """inputs: (B,S,H); lengths: (B,) int; w: (1,H) nn.Linear weight -> (B,H)."""
    B, S, H = inputs.shape
    if block_b is None:
        block_b = _pick_batch_tile(B, S, H, jnp.dtype(inputs.dtype).itemsize)
    lengths2d = lengths.reshape(B, 1).astype(jnp.int32)

    return pl.pallas_call(
        dot_attention_kernel,
        out_shape=jax.ShapeDtypeStruct((B, H), inputs.dtype),
        grid_spec=pltpu.PrefetchScalarGridSpec(
            num_scalar_prefetch=0,
            grid=(pl.cdiv(B, block_b),),
            in_specs=[
                pl.BlockSpec((block_b, S, H), lambda i: (i, 0, 0)),
                pl.BlockSpec((1, H), lambda i: (0, 0)),
                pl.BlockSpec((block_b, 1), lambda i: (i, 0)),
            ],
            out_specs=pl.BlockSpec((block_b, H), lambda i: (i, 0)),
        ),
        compiler_params=pltpu.CompilerParams(
            dimension_semantics=("parallel",),
        ),
    )(inputs, w, lengths2d)
    # TODO(synk): if S grows so large that a (Bt, S, H) slab no longer fits VMEM,
    # add a second "arbitrary" grid axis over S with an online-softmax (m, l, acc)
    # scratch accumulator, flash-attention style.


def dot_attention_ref(inputs, lengths, w):
    """Pure-JAX reference mirroring the PyTorch forward exactly."""
    B, S, H = inputs.shape
    logits = (inputs.reshape(-1, H) @ w.T).reshape(B, S)
    alphas = jax.nn.softmax(logits, axis=1)
    mask = (jnp.arange(S)[None, :] < lengths[:, None]).astype(jnp.float32)
    alphas = alphas * mask
    alphas = alphas / jnp.sum(alphas, axis=1, keepdims=True)
    return jnp.einsum("bs,bsh->bh", alphas, inputs)


if __name__ == "__main__":
    batch, seq_len, hidden = 2, 8, 32

    key = jax.random.PRNGKey(0)
    k_x, k_w = jax.random.split(key)

    inputs = jax.random.normal(k_x, (batch, seq_len, hidden), dtype=jnp.float32)
    # nn.Linear(hidden, 1, bias=False): weight shape (1, hidden), passed lane-major.
    bound = 1.0 / (hidden ** 0.5)
    w = jax.random.uniform(k_w, (1, hidden), dtype=jnp.float32,
                           minval=-bound, maxval=bound)
    lengths = jnp.array([seq_len, 5], dtype=jnp.int32)

    out = dot_attention(inputs, lengths, w)
    out = jax.block_until_ready(out)

    ref = dot_attention_ref(inputs, lengths, w)
    assert out.shape == (batch, hidden)
    assert jnp.allclose(out, ref, atol=1e-5, rtol=1e-5)

    print("KERNEL_OK")
</pallas_src>

<mosaic_0001>
module attributes {stable_mosaic.version = 11 : i64} {
  func.func @dot_attention_kernel(%arg0: i32, %arg1: memref<2x8x32xf32, #tpu.memory_space<vmem>>, %arg2: memref<1x32xf32, #tpu.memory_space<vmem>>, %arg3: memref<2x1xi32, #tpu.memory_space<vmem>>, %arg4: memref<2x32xf32, #tpu.memory_space<vmem>>) attributes {dimension_semantics = [#tpu.dimension_semantics<parallel>], iteration_bounds = array<i64: 1>, scalar_prefetch = 0 : i64, scratch_operands = 0 : i64, tpu.core_type = #tpu.core_type<tc>, window_params = [{transform_indices = @transform_0, window_bounds = array<i64: 2, 8, 32>}, {pipeline_mode = #tpu.pipeline_mode<synchronous>, transform_indices = @transform_1, window_bounds = array<i64: 1, 32>}, {transform_indices = @transform_2, window_bounds = array<i64: 2, 1>}, {transform_indices = @transform_3, window_bounds = array<i64: 2, 32>}]} {
    %c0 = arith.constant 0 : index
    %c0_0 = arith.constant 0 : index
    %c0_1 = arith.constant 0 : index
    %0 = vector.load %arg1[%c0, %c0_0, %c0_1] : memref<2x8x32xf32, #tpu.memory_space<vmem>>, vector<2x8x32xf32>
    %c0_2 = arith.constant 0 : index
    %c0_3 = arith.constant 0 : index
    %1 = vector.load %arg2[%c0_2, %c0_3] : memref<1x32xf32, #tpu.memory_space<vmem>>, vector<1x32xf32>
    %c0_4 = arith.constant 0 : index
    %c0_5 = arith.constant 0 : index
    %2 = vector.load %arg3[%c0_4, %c0_5] : memref<2x1xi32, #tpu.memory_space<vmem>>, vector<2x1xi32>
    %3 = vector.shape_cast %1 : vector<1x32xf32> to vector<1x1x32xf32>
    %4 = vector.broadcast %3 : vector<1x1x32xf32> to vector<2x8x32xf32>
    %5 = arith.mulf %0, %4 : vector<2x8x32xf32>
    %cst = arith.constant dense<0.000000e+00> : vector<2x8xf32>
    %6 = vector.multi_reduction <add>, %5, %cst [2] : vector<2x8x32xf32> to vector<2x8xf32>
    %7 = tpu.iota {dimensions = array<i32: 1>} : vector<2x8xi32>
    %8 = vector.broadcast %2 : vector<2x1xi32> to vector<2x8xi32>
    %9 = arith.cmpi slt, %7, %8 : vector<2x8xi32>
    %cst_6 = arith.constant -1.000000e+30 : f32
    %10 = vector.broadcast %cst_6 : f32 to vector<2x8xf32>
    %11 = arith.select %9, %6, %10 : vector<2x8xi1>, vector<2x8xf32>
    %cst_7 = arith.constant dense<0xFF800000> : vector<2xf32>
    %12 = vector.multi_reduction <maximumf>, %11, %cst_7 [1] : vector<2x8xf32> to vector<2xf32>
    %13 = vector.shape_cast %12 : vector<2xf32> to vector<2x1xf32>
    %14 = vector.broadcast %13 : vector<2x1xf32> to vector<2x8xf32>
    %15 = arith.subf %11, %14 : vector<2x8xf32>
    %16 = math.exp %15 : vector<2x8xf32>
    %cst_8 = arith.constant 0.000000e+00 : f32
    %17 = vector.broadcast %cst_8 : f32 to vector<2x8xf32>
    %18 = arith.select %9, %16, %17 : vector<2x8xi1>, vector<2x8xf32>
    %cst_9 = arith.constant dense<0.000000e+00> : vector<2xf32>
    %19 = vector.multi_reduction <add>, %18, %cst_9 [1] : vector<2x8xf32> to vector<2xf32>
    %20 = vector.shape_cast %19 : vector<2xf32> to vector<2x1xf32>
    %cst_10 = arith.constant 1.000000e-30 : f32
    %21 = vector.broadcast %cst_10 : f32 to vector<2x1xf32>
    %22 = arith.maximumf %20, %21 : vector<2x1xf32>
    %23 = tpu.reciprocal %22 {approx = true} : vector<2x1xf32> -> vector<2x1xf32>
    %24 = arith.mulf %22, %23 : vector<2x1xf32>
    %cst_11 = arith.constant 2.000000e+00 : f32
    %25 = vector.broadcast %cst_11 : f32 to vector<2x1xf32>
    %26 = arith.subf %25, %24 : vector<2x1xf32>
    %27 = arith.mulf %23, %26 : vector<2x1xf32>
    %28 = vector.broadcast %27 : vector<2x1xf32> to vector<2x8xf32>
    %29 = arith.mulf %18, %28 : vector<2x8xf32>
    %30 = vector.shape_cast %29 : vector<2x8xf32> to vector<2x8x1xf32>
    %31 = vector.broadcast %30 : vector<2x8x1xf32> to vector<2x8x32xf32>
    %32 = arith.mulf %0, %31 : vector<2x8x32xf32>
    %cst_12 = arith.constant dense<0.000000e+00> : vector<2x32xf32>
    %33 = vector.multi_reduction <add>, %32, %cst_12 [1] : vector<2x8x32xf32> to vector<2x32xf32>
    %c0_13 = arith.constant 0 : index
    %c0_14 = arith.constant 0 : index
    %34 = vector.load %arg4[%c0_13, %c0_14] : memref<2x32xf32, #tpu.memory_space<vmem>>, vector<2x32xf32>
    tpu.vector_store %arg4[%c0_13, %c0_14], %33 {strides = array<i32>} : memref<2x32xf32, #tpu.memory_space<vmem>>, vector<2x32xf32>,
    return
  }
  func.func @transform_0(%arg0: i32) -> (i32, i32, i32) {
    %c0_i32 = arith.constant 0 : i32
    %c0_i32_0 = arith.constant 0 : i32
    %c0_i32_1 = arith.constant 0 : i32
    return %arg0, %c0_i32, %c0_i32_0 : i32, i32, i32
  }
  func.func @transform_1(%arg0: i32) -> (i32, i32) {
    %c0_i32 = arith.constant 0 : i32
    %c0_i32_0 = arith.constant 0 : i32
    %c0_i32_1 = arith.constant 0 : i32
    return %c0_i32, %c0_i32_0 : i32, i32
  }
  func.func @transform_2(%arg0: i32) -> (i32, i32) {
    %c0_i32 = arith.constant 0 : i32
    %c0_i32_0 = arith.constant 0 : i32
    return %arg0, %c0_i32 : i32, i32
  }
  func.func @transform_3(%arg0: i32) -> (i32, i32) {
    %c0_i32 = arith.constant 0 : i32
    %c0_i32_0 = arith.constant 0 : i32
    return %arg0, %c0_i32 : i32, i32
  }
}

</mosaic_0001>

<llo_original>
// kernel: tpu_custom_call.1
$region0: #{tpu_custom_call.1}
  #allocation0 [shape = 'u32[]', space=smem, size = 0x4, offset = 0x4, fixed_abs, tag = 'smem constant byte address 0x4 - core index']
  #allocation1 [shape = 'u32[144,128]{1,0:T(1,128)}', space=vmem, size = 0x12000, scoped, tag = 'internal scratch']
  %s0 = inlined_call_operand.hbm [shape: f32[2,8,32], index: 0, kind: input, shape index: {}]
  %s1 = inlined_call_operand.vmem [shape: f32[1,32], index: 1, kind: input, shape index: {}]
  %s2 = inlined_call_operand.vmem [shape: s32[2,1], index: 2, kind: input, shape index: {}]
  %s3 = inlined_call_operand.hbm [shape: f32[2,32], index: 3, kind: output, shape index: {}]
  %s4 = sld [smem:[#allocation0]]
  $region26: #{tpu_custom_call.1} parent=0
    _
  %s6 = ssub.s32 1, %s4
  %s7 = scalar_select 0, %s6, %s4
  $region1: #{tpu_custom_call.1} parent=0
    #allocation2 [shape = 'u8[8192]{0}', space=vmem, size = 0x2000, scoped, tag = 'input window, operand 0, single buffered']
    #allocation3 [shape = 's32[1]{0}', space=sflag, size = 0x4, scoped, tag = 'scoped memory for tpu_custom_call.1']
    #allocation4 [shape = 's32[1]{0}', space=sflag, size = 0x4, scoped, tag = 'scoped memory for tpu_custom_call.1']
    #allocation5 [shape = 'u8[1024]{0}', space=vmem, size = 0x400, scoped, tag = 'output window, operand 0, single buffered']
    %8 = vsyncpa [#allocation3], 0
    %9 = vsyncpa [#allocation4], 0
    // Predicated region
    $region2: #{tpu_custom_call.1} parent=1 // pred_check
      _
    $region3: #{tpu_custom_call.1} parent=1 // pred_check_branch
      %11 = sbr.rel (0) target = $region5
    $region4: #{tpu_custom_call.1} parent=1 // pred_region
      %s13 = ssub.s32 256, 256
      %14 = vsyncadd [#allocation3], %s13
      %s15 = sshll.u32 [#allocation2], 4
      %s16 = int_to_ptr.vmem [resolvable:$true] %s15
      %21 = dma.hbm_to_vmem [thread:$0]  %s0, 256, %s16, [#allocation3], 128, 128, 8
    $region5: #{tpu_custom_call.1} parent=1 // pred_fallthru
      _
    // Predicated region
    $region6: #{tpu_custom_call.1} parent=1 // pred_check
      _
    $region7: #{tpu_custom_call.1} parent=1 // pred_check_branch
      %23 = sbr.rel (0) target = $region9
    $region8: #{tpu_custom_call.1} parent=1 // pred_region
      _
    $region9: #{tpu_custom_call.1} parent=1 // pred_fallthru
      _
    // Predicated region
    $region10: #{tpu_custom_call.1} parent=1 // pred_check
      _
    $region11: #{tpu_custom_call.1} parent=1 // pred_check_branch
      %25 = sbr.rel (0) target = $region13
    $region12: #{tpu_custom_call.1} parent=1 // pred_region
      _
    $region13: #{tpu_custom_call.1} parent=1 // pred_fallthru
      _
    // Predicated region
    $region14: #{tpu_custom_call.1} parent=1 // pred_check
      _
    $region15: #{tpu_custom_call.1} parent=1 // pred_check_branch
      %27 = sbr.rel (0) target = $region17
    $region16: #{tpu_custom_call.1} parent=1 // pred_region
      %28 = dma.done [#allocation3], 256
    $region17: #{tpu_custom_call.1} parent=1 // pred_fallthru
      _
    %v29 = vld [vmem:[#allocation2] sm:$0xff]
    %v30 = vld [vmem:[#allocation2 + $0x8] sm:$0xff]
    %v31 = vld [vmem:[%s1] sm:$0x1]
    %v32 = vld [vmem:[%s2] sm:$0x3]
    %v34 = vlaneseq
    %v35 = vshrl.u32 %v34, 7
    %v36 = vsub.s32 0, %v35
    %v37 = vrot.slane %v31, %v36
    %v39 = vmul.f32 %v29, %v37
    %v40 = vmul.f32 %v30, %v37
    %vm41 = vcmask 261120
    %v42 = vsel %vm41, %v39, 0.0
    %43 = vadd.xlane.f32.xlu0 %v42
    %v44 = vpop.xlane.xlu0 %43
    %v45 = vsel %vm41, %v40, 0.0
    %46 = vadd.xlane.f32.xlu0 %v45
    %v47 = vpop.xlane.xlu0 %46
    %v48 = vlaneseq
    %v49 = vand.u32 %v48, 127
    %50 = vset.pattern.permute.xlu0 0
    %51 = vperm.xlu0 %50, %v32
    %v52 = vpop.permute.xlu0 %51
    %vm53 = vcmp.lt.s32.totalorder %v49, %v52
    %v56 = vlaneseq
    %v57 = vshrl.u32 %v56, 7
    %v58 = vsub.s32 %v49, %v57
    %v59 = vrot.slane %v44, %v58
    %v60 = vlaneseq
    %v61 = vshrl.u32 %v60, 7
    %v62 = vsub.s32 %v49, %v61
    %v63 = vrot.slane %v47, %v62
    %vm64 = vcmask 1041409
    %v65 = vsel %vm64, %v63, %v59
    %v67 = vsel %vm53, %v65, -1e+30
    %vm68 = vcmask 58368
    %v69 = vsel %vm68, %v67, -inf
    %70 = vmax.xlane.f32.xlu0 %v69
    %v71 = vpop.xlane.xlu0 %70
    %v72 = vsub.f32 %v67, %v71
    %v73 = vmul.f32 %v72, 1.442695
    %v74 = vpow.pop %v73
    %v75 = vsel %vm53, %v74, 0.0
    %v76 = vsel %vm68, %v75, 0.0
    %77 = vadd.xlane.f32.xlu0 %v76
    %v78 = vpop.xlane.xlu0 %77
    %v79 = vmax.f32 %v78, 1e-30
    %v80 = vrcp.pop %v79
    %v81 = vmul.f32 %v79, %v80
    %v82 = vsub.f32 2.0, %v81
    %v83 = vmul.f32 %v80, %v82
    %v84 = vmul.f32 %v75, %v83
    %v85 = vlaneseq
    %v86 = vshrl.u32 %v85, 7
    %v87 = vsub.s32 0, %v86
    %v88 = vrot.slane %v84, %v87
    %90 = vbcast.lane.b32.xlu0 %v88, 256
    %v91 = vpop.permute.xlu0 %90
    %v92 = vlaneseq
    %v93 = vshrl.u32 %v92, 7
    %v94 = vsub.s32 1, %v93
    %v95 = vrot.slane %v84, %v94
    %97 = vbcast.lane.b32.xlu0 %v95, 256
    %v98 = vpop.permute.xlu0 %97
    %v99 = vmul.f32 %v29, %v91
    %v100 = vmul.f32 %v30, %v98
    %v101 = vsel %vm41, %v99, 0.0
    %v102 = vrot.slane %v101, 4
    %v103 = vadd.f32 %v101, %v102
    %v104 = vrot.slane %v103, 2
    %v105 = vadd.f32 %v103, %v104
    %v106 = vrot.slane %v105, 1
    %v107 = vadd.f32 %v105, %v106
    %v108 = vsel %vm41, %v100, 0.0
    %v109 = vrot.slane %v108, 4
    %v110 = vadd.f32 %v108, %v109
    %v111 = vrot.slane %v110, 2
    %v112 = vadd.f32 %v110, %v111
    %v113 = vrot.slane %v112, 1
    %v114 = vadd.f32 %v112, %v113
    %v117 = vsel %vm64, %v114, %v107
    %vm119 = vcmask 254976
    %120 = vst.msk [vmem:[#allocation5] sm:$0x3] %vm119, %v117
    // Predicated region
    $region18: #{tpu_custom_call.1} parent=1 // pred_check
      _
    $region19: #{tpu_custom_call.1} parent=1 // pred_check_branch
      %122 = sbr.rel (0) target = $region21
    $region20: #{tpu_custom_call.1} parent=1 // pred_region
      %s124 = ssub.s32 32, 32
      %125 = vsyncadd [#allocation4], %s124
      %s127 = sshll.u32 [#allocation5], 4
      %s128 = int_to_ptr.vmem [resolvable:$true] %s127
      %130 = dma.vmem_to_hbm [thread:$0]  %s128, 32, %s3, [#allocation4]
    $region21: #{tpu_custom_call.1} parent=1 // pred_fallthru
      _
    // Predicated region
    $region22: #{tpu_custom_call.1} parent=1 // pred_check
      _
    $region23: #{tpu_custom_call.1} parent=1 // pred_check_branch
      %132 = sbr.rel (0) target = $region25
    $region24: #{tpu_custom_call.1} parent=1 // pred_region
      %133 = dma.done [#allocation4], 32
    $region25: #{tpu_custom_call.1} parent=1 // pred_fallthru
      _
    %134 = vsyncpa [#allocation3], 1
    %135 = vsyncpa [#allocation4], 1

</llo_original>
